<compile_context>
chip_gen: v6e
topology: v6e:2x2x1
jax: 0.10.0
libtpu: 0.0.40
codegen_flags: <defaults>
</compile_context>

<pallas_src>
import functools

import jax
import jax.numpy as jnp
from jax.experimental import pallas as pl
from jax.experimental.pallas import tpu as pltpu


# ----------------------------------------------------------------------------
# tiling helper
# ----------------------------------------------------------------------------
def _pick_tile(n, max_tile):
    """Largest tile <= max_tile that divides n (multiple of 8 when possible)."""
    if n <= max_tile:
        return n
    t = (max_tile // 8) * 8
    while t >= 8:
        if n % t == 0:
            return t
        t -= 8
    return n  # fallback: single full block


# ----------------------------------------------------------------------------
# Kernel 1: fused pointwise conv/linear chain (matmul + folded BN bias + LeakyReLU)
# ----------------------------------------------------------------------------
def _chain_kernel(x_ref, *rest, alphas):
    o_ref = rest[-1]
    prm = rest[:-1]
    h = x_ref[...]
    for li, alpha in enumerate(alphas):
        w = prm[2 * li][...]          # bf16 (Cin, Cout), BN scale pre-folded
        b = prm[2 * li + 1][...]      # f32 (1, Cout)
        y = jnp.dot(h.astype(jnp.bfloat16), w, preferred_element_type=jnp.float32)
        y = y + b
        h = jnp.where(y >= 0.0, y, alpha * y)
    o_ref[...] = h.astype(o_ref.dtype)


def pointwise_chain(x2d, layers, max_tm=512):
    """x2d: (M, Cin) -> (M, Cout_last); all layers applied inside one kernel."""
    M, Cin = x2d.shape
    TM = _pick_tile(M, max_tm)
    Cout = layers[-1]["W"].shape[1]
    alphas = tuple(l_["alpha"] for l_ in layers)

    args = [x2d]
    in_specs = [pl.BlockSpec((TM, Cin), lambda i: (i, 0))]
    for layer in layers:
        cin, cout = layer["W"].shape
        args += [layer["W"], layer["bias"]]
        in_specs += [pl.BlockSpec((cin, cout), lambda i: (0, 0)),
                     pl.BlockSpec((1, cout), lambda i: (0, 0))]

    return pl.pallas_call(
        functools.partial(_chain_kernel, alphas=alphas),
        out_shape=jax.ShapeDtypeStruct((M, Cout), jnp.float32),
        grid=(M // TM,),
        in_specs=in_specs,
        out_specs=pl.BlockSpec((TM, Cout), lambda i: (i, 0)),
        compiler_params=pltpu.CompilerParams(dimension_semantics=("parallel",)),
    )(*args)


# ----------------------------------------------------------------------------
# Kernel 2: fused edge-conv chain + max over k neighbours
#   edge tensor layout: (B, k, N, 2C) bf16; output (B, N, Cout) f32
# ----------------------------------------------------------------------------
def _edge_chain_max_kernel(e_ref, *rest, k, alphas):
    o_ref = rest[-1]
    prm = rest[:-1]
    nl = len(alphas)
    ws = [prm[2 * li][...] for li in range(nl)]        # hoist weight loads
    bs = [prm[2 * li + 1][...] for li in range(nl)]
    acc = None
    for j in range(k):                                  # static unroll over k
        h = e_ref[j]                                    # (TP, 2C) bf16
        for li in range(nl):
            y = jnp.dot(h.astype(jnp.bfloat16), ws[li],
                        preferred_element_type=jnp.float32)
            y = y + bs[li]
            h = jnp.where(y >= 0.0, y, alphas[li] * y)
        acc = h if acc is None else jnp.maximum(acc, h)
    o_ref[...] = acc.astype(o_ref.dtype)


def edge_chain_max(edge, layers, max_tp=256):
    """edge: (B, k, N, 2C) bf16 -> (B, N, Cout) f32 (conv chain + max over k)."""
    B, k, N, C2 = edge.shape
    TP = _pick_tile(N, max_tp)
    Cout = layers[-1]["W"].shape[1]
    alphas = tuple(l_["alpha"] for l_ in layers)

    args = [edge]
    in_specs = [pl.BlockSpec((None, k, TP, C2), lambda b, i: (b, 0, i, 0))]
    for layer in layers:
        cin, cout = layer["W"].shape
        args += [layer["W"], layer["bias"]]
        in_specs += [pl.BlockSpec((cin, cout), lambda b, i: (0, 0)),
                     pl.BlockSpec((1, cout), lambda b, i: (0, 0))]

    # NOTE: Cout=64 (< 128 lanes) -> masked stores, but these outputs are tiny.
    return pl.pallas_call(
        functools.partial(_edge_chain_max_kernel, k=k, alphas=alphas),
        out_shape=jax.ShapeDtypeStruct((B, N, Cout), jnp.float32),
        grid=(B, N // TP),
        in_specs=in_specs,
        out_specs=pl.BlockSpec((None, TP, Cout), lambda b, i: (b, i, 0)),
        compiler_params=pltpu.CompilerParams(
            dimension_semantics=("parallel", "parallel")),
    )(*args)


# ----------------------------------------------------------------------------
# Kernel 3: pointwise conv + global max over points (grid reduction over N)
# ----------------------------------------------------------------------------
def _conv_maxN_kernel(x_ref, w_ref, b_ref, o_ref, *, alpha):
    y = jnp.dot(x_ref[...].astype(jnp.bfloat16), w_ref[...],
                preferred_element_type=jnp.float32)
    y = y + b_ref[...]
    y = jnp.where(y >= 0.0, y, alpha * y)
    m = jnp.max(y, axis=0, keepdims=True)               # (1, Cout)

    @pl.when(pl.program_id(1) == 0)
    def _():
        o_ref[...] = m

    @pl.when(pl.program_id(1) != 0)
    def _():
        o_ref[...] = jnp.maximum(o_ref[...], m)


def conv_maxN(x, layer, max_tp=512):
    """x: (B, N, Cin) -> (B, Cout): conv+BN+LeakyReLU then max over N, fused."""
    B, N, Cin = x.shape
    TP = _pick_tile(N, max_tp)
    Cout = layer["W"].shape[1]
    out = pl.pallas_call(
        functools.partial(_conv_maxN_kernel, alpha=layer["alpha"]),
        out_shape=jax.ShapeDtypeStruct((B, 1, Cout), jnp.float32),
        grid=(B, N // TP),
        in_specs=[
            pl.BlockSpec((None, TP, Cin), lambda b, i: (b, i, 0)),
            pl.BlockSpec((Cin, Cout), lambda b, i: (0, 0)),
            pl.BlockSpec((1, Cout), lambda b, i: (0, 0)),
        ],
        out_specs=pl.BlockSpec((None, 1, Cout), lambda b, i: (b, 0, 0)),
        compiler_params=pltpu.CompilerParams(
            dimension_semantics=("parallel", "arbitrary")),
    )(x, layer["W"], layer["bias"])
    return out[:, 0, :]


# ----------------------------------------------------------------------------
# Kernel 4: knn pairwise "negative squared distance", batched, epilogue fused
# ----------------------------------------------------------------------------
def _pairdist_kernel(xi_ref, xj_ref, sqi_ref, sqj_ref, o_ref):
    d = jax.lax.dot_general(xi_ref[...], xj_ref[...],
                            (((1,), (1,)), ((), ())),
                            preferred_element_type=jnp.float32)   # (TI, N)
    o_ref[...] = 2.0 * d - sqi_ref[...] - sqj_ref[...]


def pairwise_neg_dist(pts, max_ti=512):
    """pts: (B, N, C) f32 -> (B, N, N) f32  of  -|p_i - p_j|^2."""
    B, N, C = pts.shape
    TI = _pick_tile(N, max_ti)
    sq = jnp.sum(pts * pts, axis=-1)
    sqi = sq[:, :, None]                                   # (B, N, 1)
    sqj = sq[:, None, :]                                   # (B, 1, N)
    return pl.pallas_call(
        _pairdist_kernel,
        out_shape=jax.ShapeDtypeStruct((B, N, N), jnp.float32),
        grid=(B, N // TI),
        in_specs=[
            pl.BlockSpec((None, TI, C), lambda b, i: (b, i, 0)),
            pl.BlockSpec((None, N, C), lambda b, i: (b, 0, 0)),
            pl.BlockSpec((None, TI, 1), lambda b, i: (b, i, 0)),
            pl.BlockSpec((None, 1, N), lambda b, i: (b, 0, 0)),
        ],
        out_specs=pl.BlockSpec((None, TI, N), lambda b, i: (b, i, 0)),
        compiler_params=pltpu.CompilerParams(
            dimension_semantics=("parallel", "parallel")),
    )(pts, pts, sqi, sqj)


# ----------------------------------------------------------------------------
# Kernel 5: batched (B, N, 3) @ (B, 3, 3) transform
# ----------------------------------------------------------------------------
def _bmm_kernel(x_ref, t_ref, o_ref):
    o_ref[...] = jnp.dot(x_ref[...], t_ref[...], preferred_element_type=jnp.float32)


def batched_transform(pts, t, max_tp=512):
    B, N, C = pts.shape
    TP = _pick_tile(N, max_tp)
    # NOTE: last dim 3 < 128 lanes -> masked stores, but this tensor is tiny.
    return pl.pallas_call(
        _bmm_kernel,
        out_shape=jax.ShapeDtypeStruct((B, N, C), jnp.float32),
        grid=(B, N // TP),
        in_specs=[
            pl.BlockSpec((None, TP, C), lambda b, i: (b, i, 0)),
            pl.BlockSpec((None, C, C), lambda b, i: (b, 0, 0)),
        ],
        out_specs=pl.BlockSpec((None, TP, C), lambda b, i: (b, i, 0)),
        compiler_params=pltpu.CompilerParams(
            dimension_semantics=("parallel", "parallel")),
    )(pts, t)


# ----------------------------------------------------------------------------
# Kernel 6: segmentation head — conv8(per-point part) + conv9 + conv10 + conv11
#   fused; the per-batch global/label contribution to conv8 arrives as a
#   precomputed (1, 256) additive term, so the (B, N, 1344) concat/broadcast is
#   never materialised in HBM.
# ----------------------------------------------------------------------------
def _seg_head_kernel(xc_ref, glb_ref, *rest, alphas):
    o_ref = rest[-1]
    prm = rest[:-1]
    # layer 0 (conv8 split): per-point part + per-batch global part + bias
    y = jnp.dot(xc_ref[...].astype(jnp.bfloat16), prm[0][...],
                preferred_element_type=jnp.float32)
    y = y + glb_ref[...] + prm[1][...]
    h = jnp.where(y >= 0.0, y, alphas[0] * y)
    for li in range(1, len(alphas)):
        w = prm[2 * li][...]
        b = prm[2 * li + 1][...]
        y = jnp.dot(h.astype(jnp.bfloat16), w, preferred_element_type=jnp.float32)
        y = y + b
        h = jnp.where(y >= 0.0, y, alphas[li] * y)
    o_ref[...] = h.astype(o_ref.dtype)


def seg_head(xc, glb, layers, max_tp=512):
    """xc: (B, N, 256) bf16, glb: (B, 256) f32 -> (B, N, seg_num) f32."""
    B, N, C = xc.shape
    TP = _pick_tile(N, max_tp)
    Cmid = glb.shape[-1]
    Cout = layers[-1]["W"].shape[1]
    alphas = tuple(l_["alpha"] for l_ in layers)

    args = [xc, glb.reshape(B, 1, Cmid)]
    in_specs = [pl.BlockSpec((None, TP, C), lambda b, i: (b, i, 0)),
                pl.BlockSpec((None, 1, Cmid), lambda b, i: (b, 0, 0))]
    for layer in layers:
        cin, cout = layer["W"].shape
        args += [layer["W"], layer["bias"]]
        in_specs += [pl.BlockSpec((cin, cout), lambda b, i: (0, 0)),
                     pl.BlockSpec((1, cout), lambda b, i: (0, 0))]

    return pl.pallas_call(
        functools.partial(_seg_head_kernel, alphas=alphas),
        out_shape=jax.ShapeDtypeStruct((B, N, Cout), jnp.float32),
        grid=(B, N // TP),
        in_specs=in_specs,
        out_specs=pl.BlockSpec((None, TP, Cout), lambda b, i: (b, i, 0)),
        compiler_params=pltpu.CompilerParams(
            dimension_semantics=("parallel", "parallel")),
    )(*args)


# ----------------------------------------------------------------------------
# knn / get_graph_feature (top_k + gather + concat stay in XLA glue)
# ----------------------------------------------------------------------------
def edge_feature(pts, k):
    """pts: (B, N, C) f32 -> edge features (B, k, N, 2C) bf16."""
    B, N, C = pts.shape
    pd = pairwise_neg_dist(pts)                            # Pallas (B, N, N)
    # TODO(synk): top_k has no clean Pallas equivalent; using jax.lax.top_k.
    idx = jax.lax.top_k(pd, k)[1]                          # (B, N, k)
    # TODO(synk): the neighbour gather/concat could be fused into the edge-conv
    # kernel via PrefetchScalarGridSpec + in-kernel gather; kept in XLA for now.
    idx_t = jnp.transpose(idx, (0, 2, 1))                  # (B, k, N)
    b_idx = jnp.arange(B)[:, None, None]
    nbr = pts[b_idx, idx_t]                                # (B, k, N, C)
    ctr = jnp.broadcast_to(pts[:, None, :, :], (B, k, N, C))
    return jnp.concatenate([nbr - ctr, ctr], axis=-1).astype(jnp.bfloat16)


# ----------------------------------------------------------------------------
# Parameters (deterministic synthetic init; eval-mode BN folded into W + bias)
# ----------------------------------------------------------------------------
def _conv_bn(key, cin, cout, alpha=0.2):
    kw, kg, kb = jax.random.split(key, 3)
    W = jax.random.normal(kw, (cin, cout), jnp.float32) / jnp.sqrt(float(cin))
    gamma = 1.0 + 0.1 * jax.random.normal(kg, (cout,), jnp.float32)
    beta = 0.1 * jax.random.normal(kb, (cout,), jnp.float32)
    eps = 1e-5
    # fresh module, eval mode: running_mean = 0, running_var = 1
    scale = gamma / jnp.sqrt(1.0 + eps)
    Wf = (W * scale[None, :]).astype(jnp.bfloat16)         # fold BN scale into W
    return dict(W=Wf, bias=beta.reshape(1, cout), alpha=alpha)


def init_params(key, emb_dims, seg_num_all):
    keys = iter(jax.random.split(key, 24))
    p = {}
    # Transform_Net
    p["tconv1"] = _conv_bn(next(keys), 6, 64)
    p["tconv2"] = _conv_bn(next(keys), 64, 128)
    p["tconv3"] = _conv_bn(next(keys), 128, 1024)
    p["tlin1"] = _conv_bn(next(keys), 1024, 512)
    p["tlin2"] = _conv_bn(next(keys), 512, 256)
    # transform head: weight = 0, bias = eye(3), no BN / no activation
    p["ttrans"] = dict(W=jnp.zeros((256, 9), jnp.bfloat16),
                       bias=jnp.eye(3, dtype=jnp.float32).reshape(1, 9),
                       alpha=1.0)
    # DGCNN_partseg (conv4 is declared in __init__ but unused in forward;
    # conv12 / conv5 are intentionally reused in the x4 branch, as in PyTorch)
    p["conv1"] = _conv_bn(next(keys), 6, 64)
    p["conv2"] = _conv_bn(next(keys), 64, 64)
    p["conv3"] = _conv_bn(next(keys), 128, 64)
    p["conv5"] = _conv_bn(next(keys), 128, 64)
    p["conv12"] = _conv_bn(next(keys), 128, 128)
    p["conv6"] = _conv_bn(next(keys), 256, emb_dims)
    p["conv7"] = _conv_bn(next(keys), 16, 64)
    p["conv8"] = _conv_bn(next(keys), emb_dims + 64 + 256, 256)
    p["conv9"] = _conv_bn(next(keys), 256, 256)
    p["conv10"] = _conv_bn(next(keys), 256, 128)
    # conv11: plain Conv1d, no BN, no activation, no bias
    p["conv11"] = dict(
        W=(jax.random.normal(next(keys), (128, seg_num_all), jnp.float32)
           / jnp.sqrt(128.0)).astype(jnp.bfloat16),
        bias=jnp.zeros((1, seg_num_all), jnp.float32),
        alpha=1.0)
    return p


# ----------------------------------------------------------------------------
# Forward passes
# ----------------------------------------------------------------------------
def transform_net_fwd(edge0, p):
    """edge0: (B, k, N, 6) bf16 -> (B, 3, 3)."""
    B = edge0.shape[0]
    h = edge_chain_max(edge0, [p["tconv1"], p["tconv2"]])      # (B, N, 128)
    g = conv_maxN(h, p["tconv3"])                              # (B, 1024)
    t = pointwise_chain(g, [p["tlin1"], p["tlin2"], p["ttrans"]])  # (B, 9)
    return t.reshape(B, 3, 3)


def dgcnn_partseg_fwd(x, l, p, k):
    """x: (B, 3, N) (PyTorch NCW layout), l: (B, 16) -> (B, seg_num_all, N)."""
    B, _, N = x.shape
    pts = jnp.transpose(x, (0, 2, 1)).astype(jnp.float32)      # (B, N, 3)

    edge0 = edge_feature(pts, k)                               # (B, k, N, 6)
    t = transform_net_fwd(edge0, p)                            # (B, 3, 3)
    pts = batched_transform(pts, t)                            # bmm(x^T, t)

    e = edge_feature(pts, k)                                   # (B, k, N, 6)
    x1 = edge_chain_max(e, [p["conv1"], p["conv2"]])           # (B, N, 64)
    e = edge_feature(x1, k)                                    # (B, k, N, 128)
    x2 = edge_chain_max(e, [p["conv12"], p["conv3"]])          # (B, N, 64)
    e = edge_feature(x2, k)
    x3 = edge_chain_max(e, [p["conv5"]])                       # (B, N, 64)
    e = edge_feature(x3, k)
    x4 = edge_chain_max(e, [p["conv12"], p["conv5"]])          # (B, N, 64)

    xc = jnp.concatenate([x1, x2, x3, x4], axis=-1).astype(jnp.bfloat16)  # (B,N,256)
    g = conv_maxN(xc, p["conv6"])                              # (B, emb)
    lf = pointwise_chain(l, [p["conv7"]])                      # (B, 64)
    gl = jnp.concatenate([g, lf], axis=-1)                     # (B, emb+64)

    # conv8 split by input channels [global emb | label | x1 x2 x3 x4]:
    # per-batch global/label part computed once, per-point part fused in head.
    W8 = p["conv8"]["W"]
    n_gl = gl.shape[1]
    glb = pointwise_chain(
        gl, [dict(W=W8[:n_gl], bias=jnp.zeros((1, W8.shape[1]), jnp.float32),
                  alpha=1.0)])                                 # (B, 256)

    head_layers = [
        dict(W=W8[n_gl:], bias=p["conv8"]["bias"], alpha=p["conv8"]["alpha"]),
        p["conv9"], p["conv10"], p["conv11"],
    ]
    # dp1/dp2 are identity in eval mode (deterministic inference).
    out = seg_head(xc, glb, head_layers)                       # (B, N, seg)
    return jnp.transpose(out, (0, 2, 1))                       # (B, seg, N)


# ----------------------------------------------------------------------------
if __name__ == "__main__":
    B, N, K = 2, 64, 8
    EMB_DIMS = 1024          # forced by the hard-coded 1344 input of conv8
    SEG_NUM_ALL = 8

    key = jax.random.PRNGKey(0)
    kx, kl, kp = jax.random.split(key, 3)
    x = jax.random.normal(kx, (B, 3, N), jnp.float32)
    label_ids = jax.random.randint(kl, (B,), 0, 16)
    l = jax.nn.one_hot(label_ids, 16, dtype=jnp.float32)       # (B, 16)

    params = init_params(kp, EMB_DIMS, SEG_NUM_ALL)
    out = dgcnn_partseg_fwd(x, l, params, K)
    jax.block_until_ready(out)
    assert out.shape == (B, SEG_NUM_ALL, N), out.shape
    assert bool(jnp.all(jnp.isfinite(out)))
    print("KERNEL_OK")
</pallas_src>

<mosaic_0001>
module attributes {stable_mosaic.version = 11 : i64} {
  func.func @_pairdist_kernel(%arg0: i32, %arg1: i32, %arg2: memref<1x64x3xf32, #tpu.memory_space<vmem>>, %arg3: memref<1x64x3xf32, #tpu.memory_space<vmem>>, %arg4: memref<1x64x1xf32, #tpu.memory_space<vmem>>, %arg5: memref<1x1x64xf32, #tpu.memory_space<vmem>>, %arg6: memref<1x64x64xf32, #tpu.memory_space<vmem>>) attributes {dimension_semantics = [#tpu.dimension_semantics<parallel>, #tpu.dimension_semantics<parallel>], iteration_bounds = array<i64: 2, 1>, scalar_prefetch = 0 : i64, scratch_operands = 0 : i64, tpu.core_type = #tpu.core_type<tc>, window_params = [{transform_indices = @transform_0, window_bounds = array<i64: 1, 64, 3>}, {transform_indices = @transform_1, window_bounds = array<i64: 1, 64, 3>}, {transform_indices = @transform_2, window_bounds = array<i64: 1, 64, 1>}, {transform_indices = @transform_3, window_bounds = array<i64: 1, 1, 64>}, {transform_indices = @transform_4, window_bounds = array<i64: 1, 64, 64>}]} {
    %c0 = arith.constant 0 : index
    %c0_0 = arith.constant 0 : index
    %c0_1 = arith.constant 0 : index
    %0 = vector.load %arg2[%c0, %c0_0, %c0_1] : memref<1x64x3xf32, #tpu.memory_space<vmem>>, vector<1x64x3xf32>
    %1 = vector.shape_cast %0 : vector<1x64x3xf32> to vector<64x3xf32>
    %c0_2 = arith.constant 0 : index
    %c0_3 = arith.constant 0 : index
    %c0_4 = arith.constant 0 : index
    %2 = vector.load %arg3[%c0_2, %c0_3, %c0_4] : memref<1x64x3xf32, #tpu.memory_space<vmem>>, vector<1x64x3xf32>
    %3 = vector.shape_cast %2 : vector<1x64x3xf32> to vector<64x3xf32>
    %cst = arith.constant dense<0.000000e+00> : vector<64x64xf32>
    %4 = tpu.matmul %1, %3, %cst {dimension_numbers = #tpu.dot_dimension_numbers<[1], [1], [0], [0], [0, 0, 1, 0], [], []>} : vector<64x3xf32>, vector<64x3xf32>, vector<64x64xf32> -> vector<64x64xf32>
    %cst_5 = arith.constant 2.000000e+00 : f32
    %5 = vector.broadcast %cst_5 : f32 to vector<64x64xf32>
    %6 = arith.mulf %5, %4 : vector<64x64xf32>
    %c0_6 = arith.constant 0 : index
    %c0_7 = arith.constant 0 : index
    %c0_8 = arith.constant 0 : index
    %7 = vector.load %arg4[%c0_6, %c0_7, %c0_8] : memref<1x64x1xf32, #tpu.memory_space<vmem>>, vector<1x64x1xf32>
    %8 = vector.shape_cast %7 : vector<1x64x1xf32> to vector<64x1xf32>
    %9 = vector.broadcast %8 : vector<64x1xf32> to vector<64x64xf32>
    %10 = arith.subf %6, %9 : vector<64x64xf32>
    %c0_9 = arith.constant 0 : index
    %c0_10 = arith.constant 0 : index
    %c0_11 = arith.constant 0 : index
    %11 = vector.load %arg5[%c0_9, %c0_10, %c0_11] : memref<1x1x64xf32, #tpu.memory_space<vmem>>, vector<1x1x64xf32>
    %12 = vector.shape_cast %11 : vector<1x1x64xf32> to vector<1x64xf32>
    %13 = vector.broadcast %12 : vector<1x64xf32> to vector<64x64xf32>
    %14 = arith.subf %10, %13 : vector<64x64xf32>
    %c0_12 = arith.constant 0 : index
    %c0_13 = arith.constant 0 : index
    %c0_14 = arith.constant 0 : index
    %15 = vector.load %arg6[%c0_12, %c0_13, %c0_14] : memref<1x64x64xf32, #tpu.memory_space<vmem>>, vector<1x64x64xf32>
    %16 = vector.shape_cast %15 : vector<1x64x64xf32> to vector<64x64xf32>
    %17 = vector.shape_cast %14 : vector<64x64xf32> to vector<1x64x64xf32>
    tpu.vector_store %arg6[%c0_12, %c0_13, %c0_14], %17 {strides = array<i32>} : memref<1x64x64xf32, #tpu.memory_space<vmem>>, vector<1x64x64xf32>,
    return
  }
  func.func @transform_0(%arg0: i32, %arg1: i32) -> (i32, i32, i32) {
    %c0_i32 = arith.constant 0 : i32
    %c0_i32_0 = arith.constant 0 : i32
    return %arg0, %arg1, %c0_i32 : i32, i32, i32
  }
  func.func @transform_1(%arg0: i32, %arg1: i32) -> (i32, i32, i32) {
    %c0_i32 = arith.constant 0 : i32
    %c0_i32_0 = arith.constant 0 : i32
    %c0_i32_1 = arith.constant 0 : i32
    return %arg0, %c0_i32, %c0_i32_0 : i32, i32, i32
  }
  func.func @transform_2(%arg0: i32, %arg1: i32) -> (i32, i32, i32) {
    %c0_i32 = arith.constant 0 : i32
    %c0_i32_0 = arith.constant 0 : i32
    return %arg0, %arg1, %c0_i32 : i32, i32, i32
  }
  func.func @transform_3(%arg0: i32, %arg1: i32) -> (i32, i32, i32) {
    %c0_i32 = arith.constant 0 : i32
    %c0_i32_0 = arith.constant 0 : i32
    %c0_i32_1 = arith.constant 0 : i32
    return %arg0, %c0_i32, %c0_i32_0 : i32, i32, i32
  }
  func.func @transform_4(%arg0: i32, %arg1: i32) -> (i32, i32, i32) {
    %c0_i32 = arith.constant 0 : i32
    %c0_i32_0 = arith.constant 0 : i32
    return %arg0, %arg1, %c0_i32 : i32, i32, i32
  }
}

</mosaic_0001>

<llo_original>
// kernel: tpu_custom_call.1
$region0: #{tpu_custom_call.1}
  #allocation0 [shape = 'u32[]', space=smem, size = 0x4, offset = 0x4, fixed_abs, tag = 'smem constant byte address 0x4 - core index']
  #allocation1 [shape = 'u32[144,128]{1,0:T(1,128)}', space=vmem, size = 0x12000, scoped, tag = 'internal scratch']
  %s0 = inlined_call_operand.vmem [shape: f32[2,64,3], index: 0, kind: input, shape index: {}]
  %s1 = inlined_call_operand.vmem [shape: f32[2,64,3], index: 1, kind: input, shape index: {}]
  %s2 = inlined_call_operand.vmem [shape: f32[2,64,1], index: 2, kind: input, shape index: {}]
  %s3 = inlined_call_operand.vmem [shape: f32[2,1,64], index: 3, kind: input, shape index: {}]
  %s4 = inlined_call_operand.hbm [shape: f32[2,64,64], index: 4, kind: output, shape index: {}]
  %s5 = sld [smem:[#allocation0]]
  $region49: #{tpu_custom_call.1} parent=0
    _
  %s7 = ssub.s32 1, %s5
  %s8 = scalar_select 0, %s7, %s5
  $region1: #{tpu_custom_call.1} parent=0
    #allocation2 [shape = 'u8[65536]{0}', space=vmem, size = 0x10000, scoped, tag = 'output window, operand 0']
    #allocation3 [shape = 's32[2]{0}', space=sflag, size = 0x8, scoped, tag = 'scoped memory for tpu_custom_call.1']
    %9 = vsyncpa [#allocation3], 0
    %s10 = scalar_lea.sflag [#allocation3], 1
    %11 = vsyncpa %s10, 0
    loop: start=0, step=1, limit=4
    $region2: #{tpu_custom_call.1} parent=1 // loop_pre_header
      _
    $region3: #{tpu_custom_call.1} parent=1 // loop_header
      %s13 = sphi 0, %s17
      %p14 = scmp.ge.s32.totalorder %s13, 4
      %s20 = sphi 0, %s32
      %s21 = sphi 0, %s28
      %s22 = sphi 0, %s20
      %s23 = sphi 0, %s21
      %s24 = sphi 0, %s22
      %s25 = sphi 0, %s23
      %s37 = sphi 0, %s39
      %s40 = sphi 0, %s37
      %s41 = sphi 0, %s40
      %s57 = sphi 0, %s41
      %s63 = sphi 0, %s65
      %s66 = sphi 0, %s63
      %s67 = sphi 0, %s66
      %s83 = sphi 0, %s67
      %s91 = sphi 0, %s93
      %s94 = sphi 0, %s91
      %s95 = sphi 0, %s94
      %s111 = sphi 0, %s95
      %s117 = sphi 0, %s119
      %s120 = sphi 0, %s117
      %s121 = sphi 0, %s120
      %s137 = sphi 0, %s121
      %s145 = sphi 0, %s147
      %s148 = sphi 0, %s145
      %s149 = sphi 0, %s148
      %s165 = sphi 0, %s149
    $region4: #{tpu_custom_call.1} parent=1 // loop_header_branch
      %16 = sbr.rel (%p14) target = $region8
    $region5: #{tpu_custom_call.1} parent=1 // loop_body
      %s18 = ssub.s32 %s13, 1
      %s19 = ssub.s32 %s13, 2
      %s26 = sadd.s32 1, %s21
      %p27 = scmp.ge.s32.totalorder %s26, 1
      %s28 = scalar_select %p27, 0, %s26
      %s29 = sadd.s32 1, %s20
      %s30 = scalar_select %p27, %s29, %s20
      %p31 = scmp.ge.s32.totalorder %s30, 2
      %s32 = scalar_select %p31, 0, %s30
      %s33 = ssub.s32 %s20, %s32
      %s34 = ssub.s32 %s21, %s28
      %s35 = sor.u32 %s33, %s34
      %p36 = scmp.eq.s32.totalorder %s35, 0
      %s38 = sadd.s32 %s37, 1
      %s39 = scalar_select %p36, %s37, %s38
      %p42 = pneg %p36
      %p43 = scmp.eq.s32.totalorder %s13, 1
      %p44 = por %p42, %p43
      %p45 = scmp.ne.s32.totalorder %s37, %s40
      %p46 = scmp.eq.s32.totalorder %s13, 0
      %p47 = por %p45, %p46
      %p48 = scmp.ne.s32.totalorder %s37, %s40
      %p49 = scmp.eq.s32.totalorder %s18, 1
      %p50 = por %p48, %p49
      %p51 = scmp.ne.s32.totalorder %s40, %s41
      %p52 = scmp.eq.s32.totalorder %s18, 0
      %p53 = por %p51, %p52
      %p54 = scmp.ne.s32.totalorder %s40, %s41
      %p55 = scmp.eq.s32.totalorder %s19, 1
      %p56 = por %p54, %p55
      %p58 = scmp.ne.s32.totalorder %s41, %s57
      %p59 = scmp.eq.s32.totalorder %s19, 0
      %p60 = por %p58, %p59
      %s61 = ssub.s32 %s20, %s32
      %p62 = scmp.eq.s32.totalorder %s61, 0
      %s64 = sadd.s32 %s63, 1
      %s65 = scalar_select %p62, %s63, %s64
      %p68 = pneg %p62
      %p69 = scmp.eq.s32.totalorder %s13, 1
      %p70 = por %p68, %p69
      %p71 = scmp.ne.s32.totalorder %s63, %s66
      %p72 = scmp.eq.s32.totalorder %s13, 0
      %p73 = por %p71, %p72
      %p74 = scmp.ne.s32.totalorder %s63, %s66
      %p75 = scmp.eq.s32.totalorder %s18, 1
      %p76 = por %p74, %p75
      %p77 = scmp.ne.s32.totalorder %s66, %s67
      %p78 = scmp.eq.s32.totalorder %s18, 0
      %p79 = por %p77, %p78
      %p80 = scmp.ne.s32.totalorder %s66, %s67
      %p81 = scmp.eq.s32.totalorder %s19, 1
      %p82 = por %p80, %p81
      %p84 = scmp.ne.s32.totalorder %s67, %s83
      %p85 = scmp.eq.s32.totalorder %s19, 0
      %p86 = por %p84, %p85
      %s87 = ssub.s32 %s20, %s32
      %s88 = ssub.s32 %s21, %s28
      %s89 = sor.u32 %s87, %s88
      %p90 = scmp.eq.s32.totalorder %s89, 0
      %s92 = sadd.s32 %s91, 1
      %s93 = scalar_select %p90, %s91, %s92
      %p96 = pneg %p90
      %p97 = scmp.eq.s32.totalorder %s13, 1
      %p98 = por %p96, %p97
      %p99 = scmp.ne.s32.totalorder %s91, %s94
      %p100 = scmp.eq.s32.totalorder %s13, 0
      %p101 = por %p99, %p100
      %p102 = scmp.ne.s32.totalorder %s91, %s94
      %p103 = scmp.eq.s32.totalorder %s18, 1
      %p104 = por %p102, %p103
      %p105 = scmp.ne.s32.totalorder %s94, %s95
      %p106 = scmp.eq.s32.totalorder %s18, 0
      %p107 = por %p105, %p106
      %p108 = scmp.ne.s32.totalorder %s94, %s95
      %p109 = scmp.eq.s32.totalorder %s19, 1
      %p110 = por %p108, %p109
      %p112 = scmp.ne.s32.totalorder %s95, %s111
      %p113 = scmp.eq.s32.totalorder %s19, 0
      %p114 = por %p112, %p113
      %s115 = ssub.s32 %s20, %s32
      %p116 = scmp.eq.s32.totalorder %s115, 0
      %s118 = sadd.s32 %s117, 1
      %s119 = scalar_select %p116, %s117, %s118
      %p122 = pneg %p116
      %p123 = scmp.eq.s32.totalorder %s13, 1
      %p124 = por %p122, %p123
      %p125 = scmp.ne.s32.totalorder %s117, %s120
      %p126 = scmp.eq.s32.totalorder %s13, 0
      %p127 = por %p125, %p126
      %p128 = scmp.ne.s32.totalorder %s117, %s120
      %p129 = scmp.eq.s32.totalorder %s18, 1
      %p130 = por %p128, %p129
      %p131 = scmp.ne.s32.totalorder %s120, %s121
      %p132 = scmp.eq.s32.totalorder %s18, 0
      %p133 = por %p131, %p132
      %p134 = scmp.ne.s32.totalorder %s120, %s121
      %p135 = scmp.eq.s32.totalorder %s19, 1
      %p136 = por %p134, %p135
      %p138 = scmp.ne.s32.totalorder %s121, %s137
      %p139 = scmp.eq.s32.totalorder %s19, 0
      %p140 = por %p138, %p139
      %s141 = ssub.s32 %s20, %s32
      %s142 = ssub.s32 %s21, %s28
      %s143 = sor.u32 %s141, %s142
      %p144 = scmp.eq.s32.totalorder %s143, 0
      %s146 = sadd.s32 %s145, 1
      %s147 = scalar_select %p144, %s145, %s146
      %p150 = pneg %p144
      %p151 = scmp.eq.s32.totalorder %s13, 1
      %p152 = por %p150, %p151
      %p153 = scmp.ne.s32.totalorder %s145, %s148
      %p154 = scmp.eq.s32.totalorder %s13, 0
      %p155 = por %p153, %p154
      %p156 = scmp.ne.s32.totalorder %s145, %s148
      %p157 = scmp.eq.s32.totalorder %s18, 1
      %p158 = por %p156, %p157
      %p159 = scmp.ne.s32.totalorder %s148, %s149
      %p160 = scmp.eq.s32.totalorder %s18, 0
      %p161 = por %p159, %p160
      %p162 = scmp.ne.s32.totalorder %s148, %s149
      %p163 = scmp.eq.s32.totalorder %s19, 1
      %p164 = por %p162, %p163
      %p166 = scmp.ne.s32.totalorder %s149, %s165
      %p167 = scmp.eq.s32.totalorder %s19, 0
      %p168 = por %p166, %p167
      %p169 = scmp.le.s32.totalorder 1, %s13
      %p170 = scmp.lt.s32.totalorder %s13, 3
      %p171 = pnand %p169, %p170
      %p172 = pneg %p171
      // Predicated region
      $region9: #{tpu_custom_call.1} parent=5 // pred_check
        _
      $region10: #{tpu_custom_call.1} parent=5 // pred_check_branch
        %174 = sbr.rel (%p171) target = $region12
      $region11: #{tpu_custom_call.1} parent=5 // pred_region
        %s175 = ssub.s32 %s13, 1
      $region12: #{tpu_custom_call.1} parent=5 // pred_fallthru
        _
      %p176 = scmp.lt.s32.totalorder %s13, 2
      // Predicated region
      $region13: #{tpu_custom_call.1} parent=5 // pred_check
        %p177 = pneg %p176
      $region14: #{tpu_custom_call.1} parent=5 // pred_check_branch
        %179 = sbr.rel (%p177) target = $region16
      $region15: #{tpu_custom_call.1} parent=5 // pred_region
        // Predicated region
        $region17: #{tpu_custom_call.1} parent=15 // pred_check
          %p180 = pneg %p47
        $region18: #{tpu_custom_call.1} parent=15 // pred_check_branch
          %182 = sbr.rel (%p180) target = $region20
        $region19: #{tpu_custom_call.1} parent=15 // pred_region
          %s183 = smul.u32 8, %s21
          %p184 = scmp.lt.s32.totalorder %s20, 1
          %s185 = scalar_select %p184, %s20, 1
          %p186 = scmp.lt.s32.totalorder %s183, 7
          %s187 = scalar_select %p186, %s183, 7
          %s188 = smul.addr %s185, 8
          %s189 = sadd.s32 %s187, %s188
          %s190 = smul.addr %s189, 8
          %s191 = scalar_lea.vmem %s0, %s190
          %s192 = smul.u32 8, %s21
        $region20: #{tpu_custom_call.1} parent=15 // pred_fallthru
          _
        // Predicated region
        $region21: #{tpu_custom_call.1} parent=15 // pred_check
          %p193 = pneg %p73
        $region22: #{tpu_custom_call.1} parent=15 // pred_check_branch
          %195 = sbr.rel (%p193) target = $region24
        $region23: #{tpu_custom_call.1} parent=15 // pred_region
          %p196 = scmp.lt.s32.totalorder %s20, 1
          %s197 = scalar_select %p196, %s20, 1
          %s198 = smul.addr %s197, 8
          %s199 = smul.addr %s198, 8
          %s200 = scalar_lea.vmem %s1, %s199
        $region24: #{tpu_custom_call.1} parent=15 // pred_fallthru
          _
        // Predicated region
        $region25: #{tpu_custom_call.1} parent=15 // pred_check
          %p201 = pneg %p101
        $region26: #{tpu_custom_call.1} parent=15 // pred_check_branch
          %203 = sbr.rel (%p201) target = $region28
        $region27: #{tpu_custom_call.1} parent=15 // pred_region
          %s204 = smul.u32 8, %s21
          %p205 = scmp.lt.s32.totalorder %s20, 1
          %s206 = scalar_select %p205, %s20, 1
          %p207 = scmp.lt.s32.totalorder %s204, 7
          %s208 = scalar_select %p207, %s204, 7
          %s209 = smul.addr %s206, 8
          %s210 = sadd.s32 %s208, %s209
          %s211 = smul.addr %s210, 8
          %s212 = scalar_lea.vmem %s2, %s211
          %s213 = smul.u32 8, %s21
        $region28: #{tpu_custom_call.1} parent=15 // pred_fallthru
          _
        // Predicated region
        $region29: #{tpu_custom_call.1} parent=15 // pred_check
          %p214 = pneg %p127
        $region30: #{tpu_custom_call.1} parent=15 // pred_check_branch
          %216 = sbr.rel (%p214) target = $region32
        $region31: #{tpu_custom_call.1} parent=15 // pred_region
          %p217 = scmp.lt.s32.totalorder %s20, 1
          %s218 = scalar_select %p217, %s20, 1
          %s219 = scalar_lea.vmem %s3, %s218
        $region32: #{tpu_custom_call.1} parent=15 // pred_fallthru
          _
      $region16: #{tpu_custom_call.1} parent=5 // pred_fallthru
        _
      %p220 = scmp.le.s32.totalorder 1, %s13
      %p221 = scmp.lt.s32.totalorder %s13, 3
      %p222 = pnand %p220, %p221
      %p223 = pneg %p222
      // Predicated region
      $region33: #{tpu_custom_call.1} parent=5 // pred_check
        _
      $region34: #{tpu_custom_call.1} parent=5 // pred_check_branch
        %225 = sbr.rel (%p222) target = $region36
      $region35: #{tpu_custom_call.1} parent=5 // pred_region
        %s226 = ssub.s32 %s13, 1
        %s227 = smul.u32 8, %s23
        %p228 = scmp.lt.s32.totalorder %s22, 1
        %s229 = scalar_select %p228, %s22, 1
        %p230 = scmp.lt.s32.totalorder %s227, 7
        %s231 = scalar_select %p230, %s227, 7
        %s232 = smul.addr %s229, 8
        %s233 = sadd.s32 %s231, %s232
        %s234 = smul.addr %s233, 8
        %s235 = scalar_lea.vmem %s0, %s234
        %p236 = pneg %p53
        %p237 = pneg %p50
        %p238 = scmp.lt.s32.totalorder %s22, 1
        %s239 = scalar_select %p238, %s22, 1
        %s240 = smul.addr %s239, 8
        %s241 = smul.addr %s240, 8
        %s242 = scalar_lea.vmem %s1, %s241
        %p243 = pneg %p79
        %p244 = pneg %p76
        %s245 = smul.u32 8, %s23
        %p246 = scmp.lt.s32.totalorder %s22, 1
        %s247 = scalar_select %p246, %s22, 1
        %p248 = scmp.lt.s32.totalorder %s245, 7
        %s249 = scalar_select %p248, %s245, 7
        %s250 = smul.addr %s247, 8
        %s251 = sadd.s32 %s249, %s250
        %s252 = smul.addr %s251, 8
        %s253 = scalar_lea.vmem %s2, %s252
        %p254 = pneg %p107
        %p255 = pneg %p104
        %p256 = scmp.lt.s32.totalorder %s22, 1
        %s257 = scalar_select %p256, %s22, 1
        %s258 = scalar_lea.vmem %s3, %s257
        %p259 = pneg %p133
        %p260 = pneg %p130
        %p261 = pneg %p161
        %p262 = pneg %p158
        %s263 = sand.u32 %s148, 1
        %s264 = scalar_lea.sflag [#allocation3], %s263
        %s265 = sand.u32 %s148, 1
        %s266 = smul.addr %s265, 64
        %s267 = scalar_lea.vmem [#allocation2], %s266
        %s268 = smul.u32 8, %s23
        %p269 = scmp.lt.s32.totalorder %s22, 1
        %s270 = scalar_select %p269, %s22, 1
        %p271 = scmp.lt.s32.totalorder %s268, 7
        %s272 = scalar_select %p271, %s268, 7
        %s273 = smul.addr %s270, 8
        %s274 = sadd.s32 %s272, %s273
        %s275 = smul.addr %s274, 8
        %s276 = scalar_lea.vmem %s0, %s275
        %s277 = smul.u32 8, %s23
        %p278 = scmp.lt.s32.totalorder %s22, 1
        %s279 = scalar_select %p278, %s22, 1
        %s280 = smul.addr %s279, 8
        %s281 = smul.addr %s280, 8
        %s282 = scalar_lea.vmem %s1, %s281
        %s283 = smul.u32 8, %s23
        %p284 = scmp.lt.s32.totalorder %s22, 1
        %s285 = scalar_select %p284, %s22, 1
        %p286 = scmp.lt.s32.totalorder %s283, 7
        %s287 = scalar_select %p286, %s283, 7
        %s288 = smul.addr %s285, 8
        %s289 = sadd.s32 %s287, %s288
        %s290 = smul.addr %s289, 8
        %s291 = scalar_lea.vmem %s2, %s290
        %s292 = smul.u32 8, %s23
        %p293 = scmp.lt.s32.totalorder %s22, 1
        %s294 = scalar_select %p293, %s22, 1
        %s295 = scalar_lea.vmem %s3, %s294
        %s296 = smul.u32 8, %s23
        %v297 = vld [vmem:[%s276] sm:$0xff]
        %v298 = vld [vmem:[%s276 + $0x8] sm:$0xff]
        %v299 = vld [vmem:[%s276 + $0x10] sm:$0xff]
        %v300 = vld [vmem:[%s276 + $0x18] sm:$0xff]
        %v301 = vld [vmem:[%s276 + $0x20] sm:$0xff]
        %v302 = vld [vmem:[%s276 + $0x28] sm:$0xff]
        %v303 = vld [vmem:[%s276 + $0x30] sm:$0xff]
        %v304 = vld [vmem:[%s276 + $0x38] sm:$0xff]
        %v305 = vld [vmem:[%s282] sm:$0xff]
        %v306 = vld [vmem:[%s282 + $0x8] sm:$0xff]
        %v307 = vld [vmem:[%s282 + $0x10] sm:$0xff]
        %v308 = vld [vmem:[%s282 + $0x18] sm:$0xff]
        %v309 = vld [vmem:[%s282 + $0x20] sm:$0xff]
        %v310 = vld [vmem:[%s282 + $0x28] sm:$0xff]
        %v311 = vld [vmem:[%s282 + $0x30] sm:$0xff]
        %v312 = vld [vmem:[%s282 + $0x38] sm:$0xff]
        %vm313 = vcmask 23552
        %v315 = vsel %vm313, %v297, 0
        %v318 = vsel %vm313, %v298, 0
        %v321 = vsel %vm313, %v299, 0
        %v324 = vsel %vm313, %v300, 0
        %v327 = vsel %vm313, %v301, 0
        %v330 = vsel %vm313, %v302, 0
        %v333 = vsel %vm313, %v303, 0
        %v336 = vsel %vm313, %v304, 0
        %v339 = vsel %vm313, %v305, 0
        %v342 = vsel %vm313, %v306, 0
        %v345 = vsel %vm313, %v307, 0
        %v348 = vsel %vm313, %v308, 0
        %v351 = vsel %vm313, %v309, 0
        %v354 = vsel %vm313, %v310, 0
        %v357 = vsel %vm313, %v311, 0
        %v360 = vsel %vm313, %v312, 0
        %362 = vmatprep.subr.mxu0 0.0
        %363 = vmatpush1.xpose.msra.mxu0 0.0
        %364 = vmatprep.subr.mxu0 0.0
        %365 = vmatpush1.xpose.msra.mxu0 0.0
        %366 = vmatprep.subr.mxu0 0.0
        %367 = vmatpush1.xpose.msra.mxu0 0.0
        %368 = vmatprep.subr.mxu0 0.0
        %369 = vmatpush1.xpose.msra.mxu0 0.0
        %370 = vmatprep.subr.mxu0 0.0
        %371 = vmatpush1.xpose.msra.mxu0 0.0
        %372 = vmatprep.subr.mxu0 0.0
        %373 = vmatpush1.xpose.msra.mxu0 0.0
        %374 = vmatprep.subr.mxu0 0.0
        %375 = vmatpush1.xpose.msra.mxu0 0.0
        %376 = vmatprep.subr.mxu0 0.0
        %377 = vmatpush1.xpose.msra.mxu0 0.0
        %378 = vmatprep.subr.mxu0 0.0
        %379 = vmatpush1.xpose.msra.mxu0 %v360
        %380 = vmatprep.subr.mxu0 0.0
        %381 = vmatpush1.xpose.msra.mxu0 %v357
        %382 = vmatprep.subr.mxu0 0.0
        %383 = vmatpush1.xpose.msra.mxu0 %v354
        %384 = vmatprep.subr.mxu0 0.0
        %385 = vmatpush1.xpose.msra.mxu0 %v351
        %386 = vmatprep.subr.mxu0 0.0
        %387 = vmatpush1.xpose.msra.mxu0 %v348
        %388 = vmatprep.subr.mxu0 0.0
        %389 = vmatpush1.xpose.msra.mxu0 %v345
        %390 = vmatprep.subr.mxu0 0.0
        %391 = vmatpush1.xpose.msra.mxu0 %v342
        %392 = vmatprep.subr.mxu0 0.0
        %393 = vmatpush1.xpose.msra.mxu0 %v339
        %394 = vmatprep.subr.mxu0 0.0
        %395 = vmatpush2.xpose.msra.mxu0 0.0
        %396 = vmatprep.subr.mxu0 0.0
        %397 = vmatpush2.xpose.msra.mxu0 0.0
        %398 = vmatprep.subr.mxu0 0.0
        %399 = vmatpush2.xpose.msra.mxu0 0.0
        %400 = vmatprep.subr.mxu0 0.0
        %401 = vmatpush2.xpose.msra.mxu0 0.0
        %402 = vmatprep.subr.mxu0 0.0
        %403 = vmatpush2.xpose.msra.mxu0 0.0
        %404 = vmatprep.subr.mxu0 0.0
        %405 = vmatpush2.xpose.msra.mxu0 0.0
        %406 = vmatprep.subr.mxu0 0.0
        %407 = vmatpush2.xpose.msra.mxu0 0.0
        %408 = vmatprep.subr.mxu0 0.0
        %409 = vmatpush2.xpose.msra.mxu0 0.0
        %410 = vmatprep.subr.mxu0 0.0
        %411 = vmatpush2.xpose.msra.mxu0 0.0
        %412 = vmatprep.subr.mxu0 0.0
        %413 = vmatpush2.xpose.msra.mxu0 0.0
        %414 = vmatprep.subr.mxu0 0.0
        %415 = vmatpush2.xpose.msra.mxu0 0.0
        %416 = vmatprep.subr.mxu0 0.0
        %417 = vmatpush2.xpose.msra.mxu0 0.0
        %418 = vmatprep.subr.mxu0 0.0
        %419 = vmatpush2.xpose.msra.mxu0 0.0
        %420 = vmatprep.subr.mxu0 0.0
        %421 = vmatpush2.xpose.msra.mxu0 0.0
        %422 = vmatprep.subr.mxu0 0.0
        %423 = vmatpush2.xpose.msra.mxu0 0.0
        %424 = vmatprep.subr.mxu0 0.0
        %425 = vmatpush2.xpose.msra.mxu0 0.0
        %426 = vmatprep.mubr.f32.mxu0 0.0
        %427 = vmatmul.mubr.f32.gmra.mxu0 %v315
        %v428 = vpop.f32.mrf.mxu0
        %v429 = vadd.f32 0.0, %v428
        %v430 = vpop.f32.mrf.mxu0
        %431 = vmatprep.mubr.f32.mxu0 0.0
        %432 = vmatmul.mubr.f32.gmra.mxu0 %v318
        %v433 = vpop.f32.mrf.mxu0
        %v434 = vadd.f32 0.0, %v433
        %v435 = vpop.f32.mrf.mxu0
        %436 = vmatprep.mubr.f32.mxu0 0.0
        %437 = vmatmul.mubr.f32.gmra.mxu0 %v321
        %v438 = vpop.f32.mrf.mxu0
        %v439 = vadd.f32 0.0, %v438
        %v440 = vpop.f32.mrf.mxu0
        %441 = vmatprep.mubr.f32.mxu0 0.0
        %442 = vmatmul.mubr.f32.gmra.mxu0 %v324
        %v443 = vpop.f32.mrf.mxu0
        %v444 = vadd.f32 0.0, %v443
        %v445 = vpop.f32.mrf.mxu0
        %446 = vmatprep.mubr.f32.mxu0 0.0
        %447 = vmatmul.mubr.f32.gmra.mxu0 %v327
        %v448 = vpop.f32.mrf.mxu0
        %v449 = vadd.f32 0.0, %v448
        %v450 = vpop.f32.mrf.mxu0
        %451 = vmatprep.mubr.f32.mxu0 0.0
        %452 = vmatmul.mubr.f32.gmra.mxu0 %v330
        %v453 = vpop.f32.mrf.mxu0
        %v454 = vadd.f32 0.0, %v453
        %v455 = vpop.f32.mrf.mxu0
        %456 = vmatprep.mubr.f32.mxu0 0.0
        %457 = vmatmul.mubr.f32.gmra.mxu0 %v333
        %v458 = vpop.f32.mrf.mxu0
        %v459 = vadd.f32 0.0, %v458
        %v460 = vpop.f32.mrf.mxu0
        %461 = vmatprep.mubr.f32.mxu0 0.0
        %462 = vmatmul.mubr.f32.gmra.mxu0 %v336
        %v463 = vpop.f32.mrf.mxu0
        %v464 = vadd.f32 0.0, %v463
        %v465 = vpop.f32.mrf.mxu0
        %466 = vdwg.mxu0
        %v467 = vmul.f32 %v429, 2.0
        %v468 = vmul.f32 %v434, 2.0
        %v469 = vmul.f32 %v439, 2.0
        %v470 = vmul.f32 %v444, 2.0
        %v471 = vmul.f32 %v449, 2.0
        %v472 = vmul.f32 %v454, 2.0
        %v473 = vmul.f32 %v459, 2.0
        %v474 = vmul.f32 %v464, 2.0
        %v475 = vld [vmem:[%s291] sm:$0xff]
        %v476 = vld [vmem:[%s291 + $0x8] sm:$0xff]
        %v477 = vld [vmem:[%s291 + $0x10] sm:$0xff]
        %v478 = vld [vmem:[%s291 + $0x18] sm:$0xff]
        %v479 = vld [vmem:[%s291 + $0x20] sm:$0xff]
        %v480 = vld [vmem:[%s291 + $0x28] sm:$0xff]
        %v481 = vld [vmem:[%s291 + $0x30] sm:$0xff]
        %v482 = vld [vmem:[%s291 + $0x38] sm:$0xff]
        %484 = vset.pattern.permute.xlu0 0
        %485 = vperm.xlu0 %484, %v475
        %v486 = vpop.permute.xlu0 %485
        %489 = vset.pattern.permute.xlu0 0
        %490 = vperm.xlu0 %489, %v476
        %v491 = vpop.permute.xlu0 %490
        %494 = vset.pattern.permute.xlu0 0
        %495 = vperm.xlu0 %494, %v477
        %v496 = vpop.permute.xlu0 %495
        %499 = vset.pattern.permute.xlu0 0
        %500 = vperm.xlu0 %499, %v478
        %v501 = vpop.permute.xlu0 %500
        %504 = vset.pattern.permute.xlu0 0
        %505 = vperm.xlu0 %504, %v479
        %v506 = vpop.permute.xlu0 %505
        %509 = vset.pattern.permute.xlu0 0
        %510 = vperm.xlu0 %509, %v480
        %v511 = vpop.permute.xlu0 %510
        %514 = vset.pattern.permute.xlu0 0
        %515 = vperm.xlu0 %514, %v481
        %v516 = vpop.permute.xlu0 %515
        %519 = vset.pattern.permute.xlu0 0
        %520 = vperm.xlu0 %519, %v482
        %v521 = vpop.permute.xlu0 %520
        %v523 = vsub.f32 %v467, %v486
        %v524 = vsub.f32 %v468, %v491
        %v525 = vsub.f32 %v469, %v496
        %v526 = vsub.f32 %v470, %v501
        %v527 = vsub.f32 %v471, %v506
        %v528 = vsub.f32 %v472, %v511
        %v529 = vsub.f32 %v473, %v516
        %v530 = vsub.f32 %v474, %v521
        %v531 = vld [vmem:[%s295] sm:$0x1]
        %v533 = vlaneseq
        %v534 = vshrl.u32 %v533, 7
        %v535 = vsub.s32 0, %v534
        %v536 = vrot.slane %v531, %v535
        %v538 = vsub.f32 %v523, %v536
        %v539 = vsub.f32 %v524, %v536
        %v540 = vsub.f32 %v525, %v536
        %v541 = vsub.f32 %v526, %v536
        %v542 = vsub.f32 %v527, %v536
        %v543 = vsub.f32 %v528, %v536
        %v544 = vsub.f32 %v529, %v536
        %v545 = vsub.f32 %v530, %v536
        %vm546 = vcmask 523264
        %547 = vst.msk [vmem:[%s267] sm:$0xff] %vm546, %v538
        %548 = vst.msk [vmem:[%s267 + $0x8] sm:$0xff] %vm546, %v539
        %549 = vst.msk [vmem:[%s267 + $0x10] sm:$0xff] %vm546, %v540
        %550 = vst.msk [vmem:[%s267 + $0x18] sm:$0xff] %vm546, %v541
        %551 = vst.msk [vmem:[%s267 + $0x20] sm:$0xff] %vm546, %v542
        %552 = vst.msk [vmem:[%s267 + $0x28] sm:$0xff] %vm546, %v543
        %553 = vst.msk [vmem:[%s267 + $0x30] sm:$0xff] %vm546, %v544
        %554 = vst.msk [vmem:[%s267 + $0x38] sm:$0xff] %vm546, %v545
        %s555 = sand.u32 %s148, 1
        %s556 = scalar_lea.sflag [#allocation3], %s555
        %s557 = sand.u32 %s148, 1
        %s558 = smul.addr %s557, 64
        %s559 = scalar_lea.vmem [#allocation2], %s558
        // Predicated region
        $region37: #{tpu_custom_call.1} parent=35 // pred_check
          %p560 = pneg %p158
        $region38: #{tpu_custom_call.1} parent=35 // pred_check_branch
          %562 = sbr.rel (%p560) target = $region40
        $region39: #{tpu_custom_call.1} parent=35 // pred_region
          %s563 = smul.u32 8, %s23
          %s565 = ssub.s32 1024, 1024
          %566 = vsyncadd %s556, %s565
          %s567 = smul.addr %s22, 8
          %s568 = sadd.s32 %s563, %s567
          %s569 = smul.addr %s568, 128
          %s570 = scalar_lea.hbm %s4, %s569
          %s571 = sshll.u32 %s559, 4
          %s572 = int_to_ptr.vmem [resolvable:$true] %s571
          %577 = dma.vmem_to_hbm [thread:$0]  %s572, 1024, %s570, %s556, 128, 128, 8
        $region40: #{tpu_custom_call.1} parent=35 // pred_fallthru
          _
      $region36: #{tpu_custom_call.1} parent=5 // pred_fallthru
        _
      %p578 = scmp.le.s32.totalorder 2, %s13
      // Predicated region
      $region41: #{tpu_custom_call.1} parent=5 // pred_check
        %p579 = pneg %p578
      $region42: #{tpu_custom_call.1} parent=5 // pred_check_branch
        %581 = sbr.rel (%p579) target = $region44
      $region43: #{tpu_custom_call.1} parent=5 // pred_region
        %s582 = ssub.s32 %s13, 2
        // Predicated region
        $region45: #{tpu_custom_call.1} parent=43 // pred_check
          %p583 = pneg %p164
        $region46: #{tpu_custom_call.1} parent=43 // pred_check_branch
          %585 = sbr.rel (%p583) target = $region48
        $region47: #{tpu_custom_call.1} parent=43 // pred_region
          %s586 = sand.u32 %s149, 1
          %s587 = scalar_lea.sflag [#allocation3], %s586
          %s588 = sand.u32 %s149, 1
          %s589 = smul.addr %s588, 64
          %s590 = scalar_lea.vmem [#allocation2], %s589
          %591 = dma.done %s587, 1024
        $region48: #{tpu_custom_call.1} parent=43 // pred_fallthru
          _
      $region44: #{tpu_custom_call.1} parent=5 // pred_fallthru
        _
    $region6: #{tpu_custom_call.1} parent=1 // loop_footer
      %s17 = sadd.s32 1, %s13
    $region7: #{tpu_custom_call.1} parent=1 // loop_footer_branch
      %12 = sbr.rel target = $region3
    $region8: #{tpu_custom_call.1} parent=1 // loop_exit
      _
    %592 = vsyncpa [#allocation3], 1
    %s593 = scalar_lea.sflag [#allocation3], 1
    %594 = vsyncpa %s593, 1

</llo_original>
